<compile_context>
chip_gen: v7x
topology: tpu7x:2x2x1
jax: 0.10.0
libtpu: 0.0.40
codegen_flags: <defaults>
</compile_context>

<pallas_src>
import functools
import math

import jax
import jax.numpy as jnp
from jax.experimental import pallas as pl
from jax.experimental.pallas import tpu as pltpu

_LANE = 128
_SUBLANE = 8


def _vmem_capacity_bytes():
    """Physical per-core VMEM; conservative fallback = v7x's 64 MiB."""
    try:
        return int(pltpu.get_tpu_info().vmem_capacity_bytes)
    except Exception:
        return 64 << 20


def _num_tensorcores():
    """Best-effort TensorCores-per-chip (2 on v7x, 1 on v5e/v6e)."""
    try:
        info = pltpu.get_tpu_info()
        for name in ("num_tensorcores", "tensorcores_per_chip",
                     "cores_per_chip", "num_cores", "core_count"):
            n = getattr(info, name, None)
            if isinstance(n, int) and n > 0:
                return n
    except Exception:
        pass
    return 1


def _dim_semantics(num_steps):
    # Perf review: plain "parallel" may not actually split the grid across the
    # two TensorCores on v7x; CORE_PARALLEL does.  Only use it when the chip
    # really reports 2 TCs and the batch grid divides evenly; otherwise keep
    # the proven PARALLEL path (single-TC v5e/v6e, or ragged core split).
    n_tc = _num_tensorcores()
    if n_tc == 2 and num_steps >= n_tc and num_steps % n_tc == 0:
        return (pltpu.CORE_PARALLEL,)
    return (pltpu.PARALLEL,)


def _plan_tile(extent, requested, align, bytes_per_unit):
    """Pick the batch tile and an explicit VMEM limit.

    bytes_per_unit = padded + double-buffered VMEM bytes per batch element
    (x tile + q tile).  The tile is capped so it fits the current generation's
    VMEM with headroom (binding constraint on v7x's 64 MiB)."""
    cap = _vmem_capacity_bytes()
    budget = max(cap - (8 << 20), 4 << 20)            # DMA / scratch headroom
    max_tile = max(align, (budget // bytes_per_unit) // align * align)
    tile = min(requested, extent, max_tile)
    if tile != extent:
        # BlockSpec rule: non-full trailing dims must be (8, 128)-aligned.
        tile = max(align, (tile // align) * align)
    need = tile * bytes_per_unit + (2 << 20)
    # Explicit limit: above v5e's 16 MiB scoped default, never above physical.
    vmem_limit = int(min(max(need, 32 << 20), cap))
    return tile, vmem_limit


def _student_t(d, alpha):
    # alpha == 1.0 (module default): exponent -(alpha+1)/2 == -1, so the
    # t-kernel collapses to an exact reciprocal (no pow, i.e. no exp+log).
    if alpha == 1.0:
        return 1.0 / (1.0 + d)
    # Non-default alpha lowers ** to exp/log on the EUP (slightly lower
    # precision than the reciprocal path; matches f32 reference in tolerance).
    return (1.0 + d * (1.0 / alpha)) ** (-(alpha + 1.0) / 2.0)


def _kernel_bmajor(alpha, x_ref, wt_ref, q_ref):
    x = x_ref[...].astype(jnp.float32)                           # (TB, F)
    wt = wt_ref[...].astype(jnp.float32)                         # (F, C) resident
    # ||x - w||^2 = ||x||^2 + ||w||^2 - 2 x.w  -- no in-kernel transposes.
    x_sq = jnp.sum(x * x, axis=1, keepdims=True)                 # (TB, 1)
    w_sq = jnp.sum(wt * wt, axis=0, keepdims=True)               # (1, C)
    cross = jnp.dot(x, wt, preferred_element_type=jnp.float32)   # (TB, C) MXU
    d = jnp.maximum(x_sq + w_sq - 2.0 * cross, 0.0)              # clamp cancellation
    q = _student_t(d, alpha)
    q_ref[...] = (q / jnp.sum(q, axis=1, keepdims=True)).astype(q_ref.dtype)


def _kernel_fmajor(alpha, xt_ref, w_ref, qt_ref):
    xt = xt_ref[...].astype(jnp.float32)                         # (F, TB) lane-dense
    w = w_ref[...].astype(jnp.float32)                           # (C, F) resident
    x_sq = jnp.sum(xt * xt, axis=0, keepdims=True)               # (1, TB)
    w_sq = jnp.sum(w * w, axis=1, keepdims=True)                 # (C, 1)
    cross = jnp.dot(w, xt, preferred_element_type=jnp.float32)   # (C, TB) MXU
    d = jnp.maximum(w_sq + x_sq - 2.0 * cross, 0.0)
    q = _student_t(d, alpha)
    qt_ref[...] = (q / jnp.sum(q, axis=0, keepdims=True)).astype(qt_ref.dtype)


def clustering_layer(x, weights, alpha=1.0, block_rows=8192):
    """Module-contract layout: x (B, F), weights (C, F) -> q (B, C)."""
    B, F = x.shape
    C, Fw = weights.shape
    assert F == Fw
    # Padded, double-buffered VMEM bytes per batch row: x and q both pad the
    # last dim to 128 lanes (F=9, C=5) -> 512 B each, x2 for double-buffering.
    bytes_per_row = 2 * 2 * _LANE * 4
    TB, vmem_limit = _plan_tile(B, block_rows, _SUBLANE, bytes_per_row)
    num_steps = pl.cdiv(B, TB)

    # One-off tiny layout fix: centroids feature-major so the kernel never
    # transposes; (C, F) is tiny, and the (F, C) block stays VMEM-resident.
    w_t = weights.T

    kernel = functools.partial(_kernel_bmajor, float(alpha))
    return pl.pallas_call(
        kernel,
        out_shape=jax.ShapeDtypeStruct((B, C), jnp.float32),
        grid_spec=pltpu.PrefetchScalarGridSpec(
            num_scalar_prefetch=0,
            grid=(num_steps,),
            in_specs=[
                pl.BlockSpec((TB, F), lambda i: (i, 0)),   # batch-tiled input
                pl.BlockSpec((F, C), lambda i: (0, 0)),    # resident centroids
            ],
            out_specs=pl.BlockSpec((TB, C), lambda i: (i, 0)),
        ),
        compiler_params=pltpu.CompilerParams(
            dimension_semantics=_dim_semantics(num_steps),
            vmem_limit_bytes=vmem_limit,
        ),
    )(x, w_t)


def clustering_layer_fmajor(x_t, weights, alpha=1.0, block_cols=8192):
    """Feature-major layout: x_t (F, B), weights (C, F) -> q_t (C, B).

    Lane-dense on both the input DMA and the output store.  Use only when the
    caller can supply / consume the transposed layouts natively."""
    F, B = x_t.shape
    C, Fw = weights.shape
    assert F == Fw
    # Padded, double-buffered VMEM bytes per batch column: x_t pads F=9 to 16
    # sublanes (64 B/col), q_t pads C=5 to 8 sublanes (32 B/col), x2 buffers.
    f_pad = ((F + _SUBLANE - 1) // _SUBLANE) * _SUBLANE
    c_pad = ((C + _SUBLANE - 1) // _SUBLANE) * _SUBLANE
    bytes_per_col = 2 * (f_pad + c_pad) * 4
    TB, vmem_limit = _plan_tile(B, block_cols, _LANE, bytes_per_col)
    num_steps = pl.cdiv(B, TB)

    kernel = functools.partial(_kernel_fmajor, float(alpha))
    return pl.pallas_call(
        kernel,
        out_shape=jax.ShapeDtypeStruct((C, B), jnp.float32),
        grid_spec=pltpu.PrefetchScalarGridSpec(
            num_scalar_prefetch=0,
            grid=(num_steps,),
            in_specs=[
                pl.BlockSpec((F, TB), lambda i: (0, i)),   # lane-dense input tiles
                pl.BlockSpec((C, F), lambda i: (0, 0)),    # resident centroids
            ],
            out_specs=pl.BlockSpec((C, TB), lambda i: (0, i)),  # lane-dense stores
        ),
        compiler_params=pltpu.CompilerParams(
            dimension_semantics=_dim_semantics(num_steps),
            vmem_limit_bytes=vmem_limit,
        ),
    )(x_t, weights)


def xavier_uniform(key, shape):
    # Matches torch.nn.init.xavier_uniform_ for a 2D (fan_out, fan_in) tensor.
    fan_out, fan_in = shape
    limit = math.sqrt(6.0 / (fan_in + fan_out))
    return jax.random.uniform(key, shape, jnp.float32, -limit, limit)


def reference_jax(x, w, alpha=1.0):
    # Direct transcription of the PyTorch forward, for verification.
    d = jnp.sum((x[:, None, :] - w[None, :, :]) ** 2, axis=2)
    q = 1.0 / (1.0 + d / alpha)
    q = q ** ((alpha + 1.0) / 2.0)
    return (q.T / jnp.sum(q, axis=1)).T


if __name__ == "__main__":
    key = jax.random.PRNGKey(0)
    k_x, k_w, k_x2, k_x3 = jax.random.split(key, 4)

    n_features = 9   # module default
    n_clusters = 5
    weights = xavier_uniform(k_w, (n_clusters, n_features))

    # Case 1: module-default tiny batch, alpha = 1.0 (exact reciprocal path),
    # module-contract (B, F) -> (B, C) layout.  Single grid step.
    B = 8
    x = jax.random.normal(k_x, (B, n_features), jnp.float32)
    q = jax.block_until_ready(clustering_layer(x, weights, alpha=1.0))
    q_ref = reference_jax(x, weights, alpha=1.0)
    assert q.shape == (B, n_clusters)
    assert jnp.allclose(q, q_ref, atol=1e-5, rtol=1e-5)
    assert jnp.allclose(jnp.sum(q, axis=1), 1.0, atol=1e-5)

    # Case 2: multi-step tiled grid with a ragged last block and alpha != 1
    # (pow path).  Small block_rows only to exercise the pipeline in-test.
    B2 = 50
    x2 = jax.random.normal(k_x2, (B2, n_features), jnp.float32)
    q2 = jax.block_until_ready(
        clustering_layer(x2, weights, alpha=2.0, block_rows=16))
    q2_ref = reference_jax(x2, weights, alpha=2.0)
    assert q2.shape == (B2, n_clusters)
    assert jnp.allclose(q2, q2_ref, atol=1e-4, rtol=1e-4)
    assert jnp.allclose(jnp.sum(q2, axis=1), 1.0, atol=1e-4)

    # Case 3: feature-major lane-dense variant, multi-tile + ragged last tile.
    # (The test transposes x only for verification; a production caller would
    # supply the (F, B) layout natively.)
    B3 = 300
    x3 = jax.random.normal(k_x3, (B3, n_features), jnp.float32)
    q3_t = jax.block_until_ready(
        clustering_layer_fmajor(x3.T, weights, alpha=1.0, block_cols=128))
    q3_ref = reference_jax(x3, weights, alpha=1.0)
    assert q3_t.shape == (n_clusters, B3)
    assert jnp.allclose(q3_t.T, q3_ref, atol=1e-5, rtol=1e-5)
    assert jnp.allclose(jnp.sum(q3_t, axis=0), 1.0, atol=1e-5)

    print("KERNEL_OK")
</pallas_src>

<mosaic_0001>
module attributes {stable_mosaic.version = 11 : i64} {
  func.func @_kernel_bmajor(%arg0: i32, %arg1: memref<8x9xf32, #tpu.memory_space<vmem>>, %arg2: memref<9x5xf32, #tpu.memory_space<vmem>>, %arg3: memref<8x5xf32, #tpu.memory_space<vmem>>) attributes {dimension_semantics = [#tpu.dimension_semantics<parallel>], iteration_bounds = array<i64: 1>, scalar_prefetch = 0 : i64, scratch_operands = 0 : i64, tpu.core_type = #tpu.core_type<tc>, window_params = [{transform_indices = @transform_0, window_bounds = array<i64: 8, 9>}, {pipeline_mode = #tpu.pipeline_mode<synchronous>, transform_indices = @transform_1, window_bounds = array<i64: 9, 5>}, {transform_indices = @transform_2, window_bounds = array<i64: 8, 5>}]} {
    %c0 = arith.constant 0 : index
    %c0_0 = arith.constant 0 : index
    %0 = vector.load %arg1[%c0, %c0_0] : memref<8x9xf32, #tpu.memory_space<vmem>>, vector<8x9xf32>
    %c0_1 = arith.constant 0 : index
    %c0_2 = arith.constant 0 : index
    %1 = vector.load %arg2[%c0_1, %c0_2] : memref<9x5xf32, #tpu.memory_space<vmem>>, vector<9x5xf32>
    %2 = arith.mulf %0, %0 : vector<8x9xf32>
    %cst = arith.constant dense<0.000000e+00> : vector<8xf32>
    %3 = vector.multi_reduction <add>, %2, %cst [1] : vector<8x9xf32> to vector<8xf32>
    %4 = vector.shape_cast %3 : vector<8xf32> to vector<8x1xf32>
    %5 = arith.mulf %1, %1 : vector<9x5xf32>
    %cst_3 = arith.constant dense<0.000000e+00> : vector<5xf32>
    %6 = vector.multi_reduction <add>, %5, %cst_3 [0] : vector<9x5xf32> to vector<5xf32>
    %7 = vector.shape_cast %6 : vector<5xf32> to vector<1x5xf32>
    %cst_4 = arith.constant dense<0.000000e+00> : vector<8x5xf32>
    %8 = tpu.matmul %0, %1, %cst_4 {dimension_numbers = #tpu.dot_dimension_numbers<[1], [0], [0], [1], [0, 0, 1, 1], [], []>} : vector<8x9xf32>, vector<9x5xf32>, vector<8x5xf32> -> vector<8x5xf32>
    %9 = vector.broadcast %4 : vector<8x1xf32> to vector<8x5xf32>
    %10 = vector.broadcast %7 : vector<1x5xf32> to vector<8x5xf32>
    %11 = arith.addf %9, %10 : vector<8x5xf32>
    %cst_5 = arith.constant 2.000000e+00 : f32
    %12 = vector.broadcast %cst_5 : f32 to vector<8x5xf32>
    %13 = arith.mulf %12, %8 : vector<8x5xf32>
    %14 = arith.subf %11, %13 : vector<8x5xf32>
    %cst_6 = arith.constant 0.000000e+00 : f32
    %15 = vector.broadcast %cst_6 : f32 to vector<8x5xf32>
    %16 = arith.maximumf %14, %15 : vector<8x5xf32>
    %cst_7 = arith.constant 1.000000e+00 : f32
    %17 = vector.broadcast %cst_7 : f32 to vector<8x5xf32>
    %18 = arith.addf %17, %16 : vector<8x5xf32>
    %cst_8 = arith.constant 1.000000e+00 : f32
    %19 = vector.broadcast %cst_8 : f32 to vector<8x5xf32>
    %20 = arith.divf %19, %18 : vector<8x5xf32>
    %cst_9 = arith.constant dense<0.000000e+00> : vector<8xf32>
    %21 = vector.multi_reduction <add>, %20, %cst_9 [1] : vector<8x5xf32> to vector<8xf32>
    %22 = vector.shape_cast %21 : vector<8xf32> to vector<8x1xf32>
    %23 = vector.broadcast %22 : vector<8x1xf32> to vector<8x5xf32>
    %24 = arith.divf %20, %23 : vector<8x5xf32>
    %c0_10 = arith.constant 0 : index
    %c0_11 = arith.constant 0 : index
    %25 = vector.load %arg3[%c0_10, %c0_11] : memref<8x5xf32, #tpu.memory_space<vmem>>, vector<8x5xf32>
    tpu.vector_store %arg3[%c0_10, %c0_11], %24 {strides = array<i32>} : memref<8x5xf32, #tpu.memory_space<vmem>>, vector<8x5xf32>,
    return
  }
  func.func @transform_0(%arg0: i32) -> (i32, i32) {
    %c0_i32 = arith.constant 0 : i32
    %c0_i32_0 = arith.constant 0 : i32
    return %arg0, %c0_i32 : i32, i32
  }
  func.func @transform_1(%arg0: i32) -> (i32, i32) {
    %c0_i32 = arith.constant 0 : i32
    %c0_i32_0 = arith.constant 0 : i32
    %c0_i32_1 = arith.constant 0 : i32
    return %c0_i32, %c0_i32_0 : i32, i32
  }
  func.func @transform_2(%arg0: i32) -> (i32, i32) {
    %c0_i32 = arith.constant 0 : i32
    %c0_i32_0 = arith.constant 0 : i32
    return %arg0, %c0_i32 : i32, i32
  }
}

</mosaic_0001>

<llo_original>
// kernel: tpu_custom_call.1
$region0: #{tpu_custom_call.1}
  #allocation0 [shape = 'u32[]', space=smem, size = 0x4, offset = 0x4, fixed_abs, tag = 'smem constant byte address 0x4 - core index']
  #allocation1 [shape = 'u32[144,128]{1,0:T(1,128)}', space=vmem, size = 0x12000, scoped, tag = 'internal scratch']
  %s0 = inlined_call_operand.vmem [shape: f32[8,9], index: 0, kind: input, shape index: {}]
  %s1 = inlined_call_operand.vmem [shape: f32[9,5], index: 1, kind: input, shape index: {}]
  %s2 = inlined_call_operand.hbm [shape: f32[8,5], index: 2, kind: output, shape index: {}]
  %s3 = sld [smem:[#allocation0]]
  $region18: #{tpu_custom_call.1} parent=0
    _
  %s5 = ssub.s32 1, %s3
  %s6 = scalar_select 0, %s5, %s3
  $region1: #{tpu_custom_call.1} parent=0
    #allocation2 [shape = 'u8[4096]{0}', space=vmem, size = 0x1000, scoped, tag = 'output window, operand 0, single buffered']
    #allocation3 [shape = 's32[1]{0}', space=sflag, size = 0x4, scoped, tag = 'scoped memory for tpu_custom_call.1']
    %7 = vsyncpa [#allocation3], 0
    // Predicated region
    $region2: #{tpu_custom_call.1} parent=1 // pred_check
      _
    $region3: #{tpu_custom_call.1} parent=1 // pred_check_branch
      %9 = sbr.rel (0) target = $region5
    $region4: #{tpu_custom_call.1} parent=1 // pred_region
      _
    $region5: #{tpu_custom_call.1} parent=1 // pred_fallthru
      _
    // Predicated region
    $region6: #{tpu_custom_call.1} parent=1 // pred_check
      _
    $region7: #{tpu_custom_call.1} parent=1 // pred_check_branch
      %11 = sbr.rel (0) target = $region9
    $region8: #{tpu_custom_call.1} parent=1 // pred_region
      _
    $region9: #{tpu_custom_call.1} parent=1 // pred_fallthru
      _
    %v12 = vld [vmem:[%s0] sm:$0xff]
    %v13 = vld [vmem:[%s1] sm:$0xff]
    %v14 = vld [vmem:[%s1 + $0x8] sm:$0x1]
    %v15 = vmul.f32 %v12, %v12
    %vm16 = vcmask 72704
    %v17 = vsel %vm16, %v15, 0.0
    %18 = vadd.xlane.f32.xlu0 %v17
    %v19 = vpop.xlane.xlu0 %18
    %v20 = vmul.f32 %v13, %v13
    %v21 = vmul.f32 %v14, %v14
    %vm22 = vcmask 39936
    %v23 = vsel %vm22, %v20, 0.0
    %vm24 = vcmask 32768
    %v25 = vsel %vm24, %v21, 0.0
    %v26 = vadd.f32 %v23, %v25
    %v27 = vrot.slane %v26, 4
    %v28 = vadd.f32 %v26, %v27
    %v29 = vrot.slane %v28, 2
    %v30 = vadd.f32 %v28, %v29
    %v31 = vrot.slane %v30, 1
    %v32 = vadd.f32 %v30, %v31
    %v34 = vsel %vm16, %v12, 0
    %vm36 = vcmask 1040384
    %v38 = vsel %vm36, %v14, 0
    %40 = vmatprep.subr.mxu0 0.0
    %41 = vmatpush1.msra.mxu0 %v13
    %42 = vmatprep.subr.mxu0 0.0
    %43 = vmatpush1.msra.mxu0 %v38
    %44 = vmatprep.subr.mxu0 0.0
    %45 = vmatpush1.msra.mxu0 0.0
    %46 = vmatprep.subr.mxu0 0.0
    %47 = vmatpush1.msra.mxu0 0.0
    %48 = vmatprep.subr.mxu0 0.0
    %49 = vmatpush1.msra.mxu0 0.0
    %50 = vmatprep.subr.mxu0 0.0
    %51 = vmatpush1.msra.mxu0 0.0
    %52 = vmatprep.subr.mxu0 0.0
    %53 = vmatpush1.msra.mxu0 0.0
    %54 = vmatprep.subr.mxu0 0.0
    %55 = vmatpush1.msra.mxu0 0.0
    %56 = vmatprep.subr.mxu0 0.0
    %57 = vmatpush1.msra.mxu0 0.0
    %58 = vmatprep.subr.mxu0 0.0
    %59 = vmatpush1.msra.mxu0 0.0
    %60 = vmatprep.subr.mxu0 0.0
    %61 = vmatpush1.msra.mxu0 0.0
    %62 = vmatprep.subr.mxu0 0.0
    %63 = vmatpush1.msra.mxu0 0.0
    %64 = vmatprep.subr.mxu0 0.0
    %65 = vmatpush1.msra.mxu0 0.0
    %66 = vmatprep.subr.mxu0 0.0
    %67 = vmatpush1.msra.mxu0 0.0
    %68 = vmatprep.subr.mxu0 0.0
    %69 = vmatpush1.msra.mxu0 0.0
    %70 = vmatprep.subr.mxu0 0.0
    %71 = vmatpush1.msra.mxu0 0.0
    %72 = vmatprep.subr.mxu0 0.0
    %73 = vmatpush1.msra.mxu0 0.0
    %74 = vmatprep.subr.mxu0 0.0
    %75 = vmatpush1.msra.mxu0 0.0
    %76 = vmatprep.subr.mxu0 0.0
    %77 = vmatpush1.msra.mxu0 0.0
    %78 = vmatprep.subr.mxu0 0.0
    %79 = vmatpush1.msra.mxu0 0.0
    %80 = vmatprep.subr.mxu0 0.0
    %81 = vmatpush1.msra.mxu0 0.0
    %82 = vmatprep.subr.mxu0 0.0
    %83 = vmatpush1.msra.mxu0 0.0
    %84 = vmatprep.subr.mxu0 0.0
    %85 = vmatpush1.msra.mxu0 0.0
    %86 = vmatprep.subr.mxu0 0.0
    %87 = vmatpush1.msra.mxu0 0.0
    %88 = vmatprep.subr.mxu0 0.0
    %89 = vmatpush1.msra.mxu0 0.0
    %90 = vmatprep.subr.mxu0 0.0
    %91 = vmatpush1.msra.mxu0 0.0
    %92 = vmatprep.subr.mxu0 0.0
    %93 = vmatpush1.msra.mxu0 0.0
    %94 = vmatprep.subr.mxu0 0.0
    %95 = vmatpush1.msra.mxu0 0.0
    %96 = vmatprep.subr.mxu0 0.0
    %97 = vmatpush1.msra.mxu0 0.0
    %98 = vmatprep.subr.mxu0 0.0
    %99 = vmatpush1.msra.mxu0 0.0
    %100 = vmatprep.subr.mxu0 0.0
    %101 = vmatpush1.msra.mxu0 0.0
    %102 = vmatprep.subr.mxu0 0.0
    %103 = vmatpush1.msra.mxu0 0.0
    %104 = vmatprep.mubr.f32.mxu0 0.0
    %105 = vmatmul.mubr.f32.gmra.mrb[0].mxu0 %v34
    %v106 = vpop.f32.mrb[0].mxu0
    %v107 = vadd.f32 0.0, %v106
    %v108 = vpop.f32.mrb[0].mxu0
    %109 = vdwg.mxu0
    %v110 = vadd.f32 %v19, %v32
    %v111 = vmul.f32 %v107, 2.0
    %v112 = vsub.f32 %v110, %v111
    %v113 = vmax.f32 %v112, 0.0
    %v114 = vadd.f32 %v113, 1.0
    %v115 = vrcp.pop %v114
    %v116 = vmul.f32 1.0, %v115
    %v117 = vsel %vm22, %v116, 0.0
    %118 = vadd.xlane.f32.xlu0 %v117
    %v119 = vpop.xlane.xlu0 %118
    %v120 = vrcp.pop %v119
    %v121 = vmul.f32 %v116, %v120
    %122 = vst.msk [vmem:[#allocation2] sm:$0xff] %vm22, %v121
    // Predicated region
    $region10: #{tpu_custom_call.1} parent=1 // pred_check
      _
    $region11: #{tpu_custom_call.1} parent=1 // pred_check_branch
      %124 = sbr.rel (0) target = $region13
    $region12: #{tpu_custom_call.1} parent=1 // pred_region
      %s126 = ssub.s32 128, 128
      %127 = vsyncadd [#allocation3], %s126
      %s129 = sshll.u32 [#allocation2], 4
      %s130 = int_to_ptr.vmem [resolvable:$true] %s129
      %132 = dma.vmem_to_hbm [thread:$0]  %s130, 128, %s2, [#allocation3]
    $region13: #{tpu_custom_call.1} parent=1 // pred_fallthru
      _
    // Predicated region
    $region14: #{tpu_custom_call.1} parent=1 // pred_check
      _
    $region15: #{tpu_custom_call.1} parent=1 // pred_check_branch
      %134 = sbr.rel (0) target = $region17
    $region16: #{tpu_custom_call.1} parent=1 // pred_region
      %135 = dma.done [#allocation3], 128
    $region17: #{tpu_custom_call.1} parent=1 // pred_fallthru
      _
    %136 = vsyncpa [#allocation3], 1

</llo_original>
